<compile_context>
chip_gen: v7x
topology: tpu7x:2x2x1
jax: 0.10.0
libtpu: 0.0.40
codegen_flags: <defaults>
</compile_context>

<pallas_src>
import functools

import jax
import jax.numpy as jnp
from jax.experimental import pallas as pl
from jax.experimental.pallas import tpu as pltpu

# ---- module hyper-parameters (deterministic, in-script) --------------------
MAX_DROPOUT_RATE = 0.4
NUM_SAMPLES = 4
BATCH = 8
HIDDEN = 32
NUM_CLASSES = 8


def _msd_kernel(u_ref, x_ref, w_ref, b_ref, o_ref, *, keep_prob, num_samples):
    """Multi-sample dropout + linear classifier + mean over samples.

    u_ref : VMEM (S, TB, H) float32  uniforms in [0,1), one slab per sample
    x_ref : VMEM (TB, H)    float32  activations
    w_ref : VMEM (H, C)     float32  classifier weight (transposed), resident
    b_ref : VMEM (1, C)     float32  classifier bias
    o_ref : VMEM (TB, C)    float32
    """
    u = u_ref[...]                                      # (S, TB, H)
    # Per-element keep count summed over the S dropout samples.
    count = jnp.sum((u < jnp.float32(keep_prob)).astype(jnp.float32), axis=0)
    # Fold 1/keep_prob (inverted-dropout scale) and 1/num_samples (mean) into
    # a single compile-time constant -> one VPU multiply pass.
    scale = jnp.float32(1.0 / (keep_prob * num_samples))
    x_eff = x_ref[...] * count * scale                  # (TB, H)
    # Single MXU matmul on the mean-masked activations, bias added once.
    o_ref[...] = (
        jnp.dot(x_eff, w_ref[...], preferred_element_type=jnp.float32)
        + b_ref[...]
    )


def multi_sample_dropout(out, weight_t, bias, key,
                         *, max_dropout_rate=MAX_DROPOUT_RATE,
                         num_samples=NUM_SAMPLES, tb=128):
    """out: (B, H) f32, weight_t: (H, C) f32, bias: (C,) f32, key: PRNGKey."""
    B, H = out.shape
    C = weight_t.shape[1]
    keep_prob = 1.0 - max_dropout_rate

    # One RNG draw for every sample and every row (no per-sample tiny draws,
    # and every batch tile gets independent masks).
    u = jax.random.uniform(key, (num_samples, B, H), dtype=jnp.float32)

    tb = min(tb, B)
    grid = (pl.cdiv(B, tb),)

    kernel = functools.partial(_msd_kernel,
                               keep_prob=keep_prob,
                               num_samples=num_samples)
    bias2d = bias.reshape(1, C)

    return pl.pallas_call(
        kernel,
        out_shape=jax.ShapeDtypeStruct((B, C), jnp.float32),
        grid=grid,
        in_specs=[
            pl.BlockSpec((num_samples, tb, H), lambda i: (0, i, 0)),
            pl.BlockSpec((tb, H), lambda i: (i, 0)),
            pl.BlockSpec((H, C), lambda i: (0, 0)),   # weight resident
            pl.BlockSpec((1, C), lambda i: (0, 0)),   # bias resident
        ],
        out_specs=pl.BlockSpec((tb, C), lambda i: (i, 0)),
        compiler_params=pltpu.CompilerParams(
            dimension_semantics=("parallel",)),
    )(u, out, weight_t, bias2d)


if __name__ == "__main__":
    key = jax.random.PRNGKey(0)
    k_x, k_w, k_b, k_drop = jax.random.split(key, 4)

    # deterministic "classifier" parameters (nn.Linear(HIDDEN, NUM_CLASSES))
    x = jax.random.normal(k_x, (BATCH, HIDDEN), dtype=jnp.float32)
    w = jax.random.normal(k_w, (NUM_CLASSES, HIDDEN), dtype=jnp.float32) * 0.05
    b = jax.random.normal(k_b, (NUM_CLASSES,), dtype=jnp.float32) * 0.01

    y = multi_sample_dropout(x, w.T, b, k_drop)
    y = jax.block_until_ready(y)

    assert y.shape == (BATCH, NUM_CLASSES)
    assert jnp.all(jnp.isfinite(y))

    # Reference check: mean_s(Dropout_s(x) @ W^T + b) with the same uniforms.
    u = jax.random.uniform(k_drop, (NUM_SAMPLES, BATCH, HIDDEN),
                           dtype=jnp.float32)
    keep_prob = 1.0 - MAX_DROPOUT_RATE
    masks = (u < keep_prob).astype(jnp.float32)
    ref = jnp.mean(
        jnp.stack([ (x * masks[s] / keep_prob) @ w.T + b
                    for s in range(NUM_SAMPLES) ], axis=0), axis=0)
    assert jnp.allclose(y, ref, atol=1e-5, rtol=1e-5)

    print("KERNEL_OK")
</pallas_src>

<mosaic_0001>
module attributes {stable_mosaic.version = 11 : i64} {
  func.func @_msd_kernel(%arg0: i32, %arg1: memref<4x8x32xf32, #tpu.memory_space<vmem>>, %arg2: memref<8x32xf32, #tpu.memory_space<vmem>>, %arg3: memref<32x8xf32, #tpu.memory_space<vmem>>, %arg4: memref<1x8xf32, #tpu.memory_space<vmem>>, %arg5: memref<8x8xf32, #tpu.memory_space<vmem>>) attributes {dimension_semantics = [#tpu.dimension_semantics<parallel>], iteration_bounds = array<i64: 1>, scalar_prefetch = 0 : i64, scratch_operands = 0 : i64, tpu.core_type = #tpu.core_type<tc>, window_params = [{transform_indices = @transform_0, window_bounds = array<i64: 4, 8, 32>}, {transform_indices = @transform_1, window_bounds = array<i64: 8, 32>}, {pipeline_mode = #tpu.pipeline_mode<synchronous>, transform_indices = @transform_2, window_bounds = array<i64: 32, 8>}, {pipeline_mode = #tpu.pipeline_mode<synchronous>, transform_indices = @transform_3, window_bounds = array<i64: 1, 8>}, {transform_indices = @transform_4, window_bounds = array<i64: 8, 8>}]} {
    %c0 = arith.constant 0 : index
    %c0_0 = arith.constant 0 : index
    %c0_1 = arith.constant 0 : index
    %0 = vector.load %arg1[%c0, %c0_0, %c0_1] : memref<4x8x32xf32, #tpu.memory_space<vmem>>, vector<4x8x32xf32>
    %cst = arith.constant 6.000000e-01 : f32
    %1 = vector.broadcast %cst : f32 to vector<4x8x32xf32>
    %2 = arith.cmpf olt, %0, %1 : vector<4x8x32xf32>
    %3 = arith.extui %2 : vector<4x8x32xi1> to vector<4x8x32xi32>
    %4 = arith.sitofp %3 : vector<4x8x32xi32> to vector<4x8x32xf32>
    %cst_2 = arith.constant dense<0.000000e+00> : vector<8x32xf32>
    %5 = vector.multi_reduction <add>, %4, %cst_2 [0] : vector<4x8x32xf32> to vector<8x32xf32>
    %c0_3 = arith.constant 0 : index
    %c0_4 = arith.constant 0 : index
    %6 = vector.load %arg2[%c0_3, %c0_4] : memref<8x32xf32, #tpu.memory_space<vmem>>, vector<8x32xf32>
    %7 = arith.mulf %6, %5 : vector<8x32xf32>
    %cst_5 = arith.constant 0.416666657 : f32
    %8 = vector.broadcast %cst_5 : f32 to vector<8x32xf32>
    %9 = arith.mulf %7, %8 : vector<8x32xf32>
    %c0_6 = arith.constant 0 : index
    %c0_7 = arith.constant 0 : index
    %10 = vector.load %arg3[%c0_6, %c0_7] : memref<32x8xf32, #tpu.memory_space<vmem>>, vector<32x8xf32>
    %cst_8 = arith.constant dense<0.000000e+00> : vector<8x8xf32>
    %11 = tpu.matmul %9, %10, %cst_8 {dimension_numbers = #tpu.dot_dimension_numbers<[1], [0], [0], [1], [0, 0, 1, 1], [], []>} : vector<8x32xf32>, vector<32x8xf32>, vector<8x8xf32> -> vector<8x8xf32>
    %c0_9 = arith.constant 0 : index
    %c0_10 = arith.constant 0 : index
    %12 = vector.load %arg4[%c0_9, %c0_10] : memref<1x8xf32, #tpu.memory_space<vmem>>, vector<1x8xf32>
    %13 = vector.broadcast %12 : vector<1x8xf32> to vector<8x8xf32>
    %14 = arith.addf %11, %13 : vector<8x8xf32>
    %c0_11 = arith.constant 0 : index
    %c0_12 = arith.constant 0 : index
    %15 = vector.load %arg5[%c0_11, %c0_12] : memref<8x8xf32, #tpu.memory_space<vmem>>, vector<8x8xf32>
    tpu.vector_store %arg5[%c0_11, %c0_12], %14 {strides = array<i32>} : memref<8x8xf32, #tpu.memory_space<vmem>>, vector<8x8xf32>,
    return
  }
  func.func @transform_0(%arg0: i32) -> (i32, i32, i32) {
    %c0_i32 = arith.constant 0 : i32
    %c0_i32_0 = arith.constant 0 : i32
    %c0_i32_1 = arith.constant 0 : i32
    return %c0_i32, %arg0, %c0_i32_0 : i32, i32, i32
  }
  func.func @transform_1(%arg0: i32) -> (i32, i32) {
    %c0_i32 = arith.constant 0 : i32
    %c0_i32_0 = arith.constant 0 : i32
    return %arg0, %c0_i32 : i32, i32
  }
  func.func @transform_2(%arg0: i32) -> (i32, i32) {
    %c0_i32 = arith.constant 0 : i32
    %c0_i32_0 = arith.constant 0 : i32
    %c0_i32_1 = arith.constant 0 : i32
    return %c0_i32, %c0_i32_0 : i32, i32
  }
  func.func @transform_3(%arg0: i32) -> (i32, i32) {
    %c0_i32 = arith.constant 0 : i32
    %c0_i32_0 = arith.constant 0 : i32
    %c0_i32_1 = arith.constant 0 : i32
    return %c0_i32, %c0_i32_0 : i32, i32
  }
  func.func @transform_4(%arg0: i32) -> (i32, i32) {
    %c0_i32 = arith.constant 0 : i32
    %c0_i32_0 = arith.constant 0 : i32
    return %arg0, %c0_i32 : i32, i32
  }
}

</mosaic_0001>

<llo_original>
// kernel: tpu_custom_call.1
$region0: #{tpu_custom_call.1}
  #allocation0 [shape = 'u32[]', space=smem, size = 0x4, offset = 0x4, fixed_abs, tag = 'smem constant byte address 0x4 - core index']
  #allocation1 [shape = 'u32[144,128]{1,0:T(1,128)}', space=vmem, size = 0x12000, scoped, tag = 'internal scratch']
  %s0 = inlined_call_operand.vmem [shape: f32[4,8,32], index: 0, kind: input, shape index: {}]
  %s1 = inlined_call_operand.vmem [shape: f32[8,32], index: 1, kind: input, shape index: {}]
  %s2 = inlined_call_operand.vmem [shape: f32[32,8], index: 2, kind: input, shape index: {}]
  %s3 = inlined_call_operand.vmem [shape: f32[1,8], index: 3, kind: input, shape index: {}]
  %s4 = inlined_call_operand.hbm [shape: f32[8,8], index: 4, kind: output, shape index: {}]
  %s5 = sld [smem:[#allocation0]]
  $region26: #{tpu_custom_call.1} parent=0
    _
  %s7 = ssub.s32 1, %s5
  %s8 = scalar_select 0, %s7, %s5
  $region1: #{tpu_custom_call.1} parent=0
    #allocation2 [shape = 'u8[4096]{0}', space=vmem, size = 0x1000, scoped, tag = 'output window, operand 0, single buffered']
    #allocation3 [shape = 's32[1]{0}', space=sflag, size = 0x4, scoped, tag = 'scoped memory for tpu_custom_call.1']
    %9 = vsyncpa [#allocation3], 0
    // Predicated region
    $region2: #{tpu_custom_call.1} parent=1 // pred_check
      _
    $region3: #{tpu_custom_call.1} parent=1 // pred_check_branch
      %11 = sbr.rel (0) target = $region5
    $region4: #{tpu_custom_call.1} parent=1 // pred_region
      _
    $region5: #{tpu_custom_call.1} parent=1 // pred_fallthru
      _
    // Predicated region
    $region6: #{tpu_custom_call.1} parent=1 // pred_check
      _
    $region7: #{tpu_custom_call.1} parent=1 // pred_check_branch
      %13 = sbr.rel (0) target = $region9
    $region8: #{tpu_custom_call.1} parent=1 // pred_region
      _
    $region9: #{tpu_custom_call.1} parent=1 // pred_fallthru
      _
    // Predicated region
    $region10: #{tpu_custom_call.1} parent=1 // pred_check
      _
    $region11: #{tpu_custom_call.1} parent=1 // pred_check_branch
      %15 = sbr.rel (0) target = $region13
    $region12: #{tpu_custom_call.1} parent=1 // pred_region
      _
    $region13: #{tpu_custom_call.1} parent=1 // pred_fallthru
      _
    // Predicated region
    $region14: #{tpu_custom_call.1} parent=1 // pred_check
      _
    $region15: #{tpu_custom_call.1} parent=1 // pred_check_branch
      %17 = sbr.rel (0) target = $region17
    $region16: #{tpu_custom_call.1} parent=1 // pred_region
      _
    $region17: #{tpu_custom_call.1} parent=1 // pred_fallthru
      _
    %v18 = vld [vmem:[%s0] sm:$0xff]
    %v19 = vld [vmem:[%s0 + $0x8] sm:$0xff]
    %v20 = vld [vmem:[%s0 + $0x10] sm:$0xff]
    %v21 = vld [vmem:[%s0 + $0x18] sm:$0xff]
    %vm22 = vcmp.lt.f32.partialorder %v18, 0.6
    %vm23 = vcmp.lt.f32.partialorder %v19, 0.6
    %vm24 = vcmp.lt.f32.partialorder %v20, 0.6
    %vm25 = vcmp.lt.f32.partialorder %v21, 0.6
    %v26 = vsel %vm22, 1, 0
    %v27 = vsel %vm23, 1, 0
    %v28 = vsel %vm24, 1, 0
    %v29 = vsel %vm25, 1, 0
    %v30 = vcvt.s32.f32 %v26
    %v31 = vcvt.s32.f32 %v27
    %v32 = vcvt.s32.f32 %v28
    %v33 = vcvt.s32.f32 %v29
    %vm34 = vcmask 261120
    %v35 = vsel %vm34, %v30, 0.0
    %v36 = vsel %vm34, %v31, 0.0
    %v37 = vadd.f32 %v35, %v36
    %v38 = vsel %vm34, %v32, 0.0
    %v39 = vadd.f32 %v37, %v38
    %v40 = vsel %vm34, %v33, 0.0
    %v41 = vadd.f32 %v39, %v40
    %v42 = vld [vmem:[%s1] sm:$0xff]
    %v43 = vmul.f32 %v42, %v41
    %v44 = vmul.f32 %v43, 0.41666666
    %v45 = vld [vmem:[%s2] sm:$0xff]
    %v46 = vld [vmem:[%s2 + $0x8] sm:$0xff]
    %v47 = vld [vmem:[%s2 + $0x10] sm:$0xff]
    %v48 = vld [vmem:[%s2 + $0x18] sm:$0xff]
    %v49 = vld [vmem:[%s3] sm:$0x1]
    %v51 = vlaneseq
    %v52 = vshrl.u32 %v51, 7
    %v53 = vsub.s32 0, %v52
    %v54 = vrot.slane %v49, %v53
    %v57 = vsel %vm34, %v44, 0
    %59 = vmatprep.subr.mxu0 0.0
    %60 = vmatpush1.msra.mxu0 %v45
    %61 = vmatprep.subr.mxu0 0.0
    %62 = vmatpush1.msra.mxu0 %v46
    %63 = vmatprep.subr.mxu0 0.0
    %64 = vmatpush1.msra.mxu0 %v47
    %65 = vmatprep.subr.mxu0 0.0
    %66 = vmatpush1.msra.mxu0 %v48
    %67 = vmatprep.subr.mxu0 0.0
    %68 = vmatpush1.msra.mxu0 0.0
    %69 = vmatprep.subr.mxu0 0.0
    %70 = vmatpush1.msra.mxu0 0.0
    %71 = vmatprep.subr.mxu0 0.0
    %72 = vmatpush1.msra.mxu0 0.0
    %73 = vmatprep.subr.mxu0 0.0
    %74 = vmatpush1.msra.mxu0 0.0
    %75 = vmatprep.subr.mxu0 0.0
    %76 = vmatpush1.msra.mxu0 0.0
    %77 = vmatprep.subr.mxu0 0.0
    %78 = vmatpush1.msra.mxu0 0.0
    %79 = vmatprep.subr.mxu0 0.0
    %80 = vmatpush1.msra.mxu0 0.0
    %81 = vmatprep.subr.mxu0 0.0
    %82 = vmatpush1.msra.mxu0 0.0
    %83 = vmatprep.subr.mxu0 0.0
    %84 = vmatpush1.msra.mxu0 0.0
    %85 = vmatprep.subr.mxu0 0.0
    %86 = vmatpush1.msra.mxu0 0.0
    %87 = vmatprep.subr.mxu0 0.0
    %88 = vmatpush1.msra.mxu0 0.0
    %89 = vmatprep.subr.mxu0 0.0
    %90 = vmatpush1.msra.mxu0 0.0
    %91 = vmatprep.subr.mxu0 0.0
    %92 = vmatpush1.msra.mxu0 0.0
    %93 = vmatprep.subr.mxu0 0.0
    %94 = vmatpush1.msra.mxu0 0.0
    %95 = vmatprep.subr.mxu0 0.0
    %96 = vmatpush1.msra.mxu0 0.0
    %97 = vmatprep.subr.mxu0 0.0
    %98 = vmatpush1.msra.mxu0 0.0
    %99 = vmatprep.subr.mxu0 0.0
    %100 = vmatpush1.msra.mxu0 0.0
    %101 = vmatprep.subr.mxu0 0.0
    %102 = vmatpush1.msra.mxu0 0.0
    %103 = vmatprep.subr.mxu0 0.0
    %104 = vmatpush1.msra.mxu0 0.0
    %105 = vmatprep.subr.mxu0 0.0
    %106 = vmatpush1.msra.mxu0 0.0
    %107 = vmatprep.subr.mxu0 0.0
    %108 = vmatpush1.msra.mxu0 0.0
    %109 = vmatprep.subr.mxu0 0.0
    %110 = vmatpush1.msra.mxu0 0.0
    %111 = vmatprep.subr.mxu0 0.0
    %112 = vmatpush1.msra.mxu0 0.0
    %113 = vmatprep.subr.mxu0 0.0
    %114 = vmatpush1.msra.mxu0 0.0
    %115 = vmatprep.subr.mxu0 0.0
    %116 = vmatpush1.msra.mxu0 0.0
    %117 = vmatprep.subr.mxu0 0.0
    %118 = vmatpush1.msra.mxu0 0.0
    %119 = vmatprep.subr.mxu0 0.0
    %120 = vmatpush1.msra.mxu0 0.0
    %121 = vmatprep.subr.mxu0 0.0
    %122 = vmatpush1.msra.mxu0 0.0
    %123 = vmatprep.mubr.f32.mxu0 0.0
    %124 = vmatmul.mubr.f32.gmra.mrb[0].mxu0 %v57
    %v125 = vpop.f32.mrb[0].mxu0
    %v126 = vadd.f32 %v54, %v125
    %v127 = vpop.f32.mrb[0].mxu0
    %128 = vdwg.mxu0
    %vm129 = vcmask 64512
    %130 = vst.msk [vmem:[#allocation2] sm:$0xff] %vm129, %v126
    // Predicated region
    $region18: #{tpu_custom_call.1} parent=1 // pred_check
      _
    $region19: #{tpu_custom_call.1} parent=1 // pred_check_branch
      %132 = sbr.rel (0) target = $region21
    $region20: #{tpu_custom_call.1} parent=1 // pred_region
      %s134 = ssub.s32 128, 128
      %135 = vsyncadd [#allocation3], %s134
      %s137 = sshll.u32 [#allocation2], 4
      %s138 = int_to_ptr.vmem [resolvable:$true] %s137
      %140 = dma.vmem_to_hbm [thread:$0]  %s138, 128, %s4, [#allocation3]
    $region21: #{tpu_custom_call.1} parent=1 // pred_fallthru
      _
    // Predicated region
    $region22: #{tpu_custom_call.1} parent=1 // pred_check
      _
    $region23: #{tpu_custom_call.1} parent=1 // pred_check_branch
      %142 = sbr.rel (0) target = $region25
    $region24: #{tpu_custom_call.1} parent=1 // pred_region
      %143 = dma.done [#allocation3], 128
    $region25: #{tpu_custom_call.1} parent=1 // pred_fallthru
      _
    %144 = vsyncpa [#allocation3], 1

</llo_original>
